<compile_context>
chip_gen: v6e
topology: v6e:2x2x1
jax: 0.10.0
libtpu: 0.0.40
codegen_flags: <defaults>
</compile_context>

<pallas_src>
import jax
import jax.numpy as jnp
from jax import lax
from jax.experimental import pallas as pl
from jax.experimental.pallas import tpu as pltpu

EPS = 1e-8  # matches torch.sqrt(var + 1e-08)


# ----------------------------------------------------------------------------
# Kernels
# ----------------------------------------------------------------------------
def _make_single_pass_kernel(norm_var):
    def kernel(x_ref, o_ref):
        # x_ref: (Bblk, T, D) native fbank layout; o_ref: (Bblk, D, T).
        x = x_ref[...].astype(jnp.float32)
        # Mean/var over frames (axis=1) in the native layout: frame axis is the
        # sublane axis -> cross-vreg VALU adds + one sublane reduce (no XLU
        # lane reductions).
        mean = jnp.mean(x, axis=1, keepdims=True)
        xc = x - mean
        if norm_var:
            var = jnp.mean(xc * xc, axis=1, keepdims=True)  # unbiased=False
            # Exact reciprocal-sqrt on the tiny (Bblk, 1, D) array; the bulk op
            # below stays a VPU multiply.
            xc = xc * (1.0 / jnp.sqrt(var + EPS))
        # Cast to output dtype BEFORE the transpose so the XLU moves narrow
        # vregs for bf16 outputs; single (T, D)->(D, T) transpose, last.
        o_ref[...] = jnp.transpose(xc.astype(o_ref.dtype), (0, 2, 1))
    return kernel


def _make_stats_kernel(t_total, t_tile):
    # Pass 1 of the two-pass (long-utterance) path: accumulate per-(b, d) sum
    # and sum-of-squares across T tiles into the resident (2, D) output block.
    need_mask = (t_total % t_tile) != 0
    def kernel(x_ref, s_ref):
        t = pl.program_id(1)

        @pl.when(t == 0)
        def _():
            s_ref[...] = jnp.zeros_like(s_ref)

        x = x_ref[...].astype(jnp.float32)            # (t_tile, D)
        if need_mask:
            row = lax.broadcasted_iota(jnp.int32, x.shape, 0) + t * t_tile
            x = jnp.where(row < t_total, x, 0.0)      # zero the padded tail rows
        sums = jnp.concatenate(
            [jnp.sum(x, axis=0, keepdims=True),
             jnp.sum(x * x, axis=0, keepdims=True)], axis=0)   # (2, D)
        s_ref[...] += sums
    return kernel


def _make_normalize_kernel(t_total, norm_var):
    # Pass 2 of the two-pass path: normalize one T tile and transpose-store it.
    inv_t = 1.0 / float(t_total)
    def kernel(x_ref, s_ref, o_ref):
        x = x_ref[...].astype(jnp.float32)            # (t_tile, D)
        s = s_ref[...]                                # (2, D): [sum, sumsq]
        mean = s[0:1, :] * inv_t
        xc = x - mean
        if norm_var:
            # E[x^2] - E[x]^2 (unbiased=False).  Guard tiny negative values
            # from fp cancellation.
            var = jnp.maximum(s[1:2, :] * inv_t - mean * mean, 0.0)
            xc = xc * (1.0 / jnp.sqrt(var + EPS))
        o_ref[...] = jnp.transpose(xc.astype(o_ref.dtype), (1, 0))
    return kernel


# ----------------------------------------------------------------------------
# Wrapper
# ----------------------------------------------------------------------------
def _vmem_capacity_bytes():
    try:
        return int(pltpu.get_tpu_info().vmem_capacity_bytes)
    except Exception:
        return 64 * 2**20  # conservative fallback (v7x per-TC VMEM)


def _get_feats_single_pass(x, norm_var, out_dtype, budget, cap, per_item):
    B, T, D = x.shape
    in_it = x.dtype.itemsize
    out_it = jnp.dtype(out_dtype).itemsize

    # Block several utterances per grid step so small per-utterance tiles
    # amortize the ~0.35 us per-step overhead and reach the HBM roofline.
    target_in_bytes = 2 * 2**20
    bblk = max(1, min(B,
                      budget // per_item,
                      max(1, target_in_bytes // max(1, T * D * in_it))))
    if B >= 2:
        bblk = min(bblk, (B + 1) // 2)   # keep >=2 grid steps for v7x's 2 TCs
    while B % bblk:                      # keep blocks uniform (no padded batch)
        bblk -= 1
    grid = (B // bblk,)

    need = bblk * per_item
    vmem_limit = int(min(cap - 4 * 2**20, max(32 * 2**20, need + 2 * 2**20)))

    elems = B * T * D
    cost = pl.CostEstimate(
        flops=(5 if norm_var else 2) * elems,
        transcendentals=(B * D) if norm_var else 0,
        bytes_accessed=elems * (in_it + out_it))

    # TODO(synk): if T < 128 frames is possible, the output last dim forces
    # masked partial stores; batch such utterances or pad T in the caller.
    return pl.pallas_call(
        _make_single_pass_kernel(norm_var),
        out_shape=jax.ShapeDtypeStruct((B, D, T), out_dtype),
        grid=grid,
        in_specs=[pl.BlockSpec((bblk, T, D), lambda i: (i, 0, 0))],
        out_specs=pl.BlockSpec((bblk, D, T), lambda i: (i, 0, 0)),
        compiler_params=pltpu.CompilerParams(
            dimension_semantics=("parallel",),
            vmem_limit_bytes=vmem_limit),
        cost_estimate=cost,
    )(x)


def _get_feats_two_pass(x, norm_var, out_dtype, budget, cap, t_tile):
    """T-tiled fallback for utterances whose full-T tile does not fit VMEM.

    Pass 1 reads the features once and accumulates per-(b, d) sum / sumsq;
    pass 2 re-reads them, normalizes, and writes the transposed output.  The
    T axis gives parallel grid steps, so both v7x TensorCores get work even
    at B=1.
    """
    B, T, D = x.shape
    in_it = x.dtype.itemsize
    out_it = jnp.dtype(out_dtype).itemsize

    per_row = D * (2 * in_it + 2 * out_it + 3 * 4)
    if t_tile is None:
        t_tile = max(128, (budget // per_row) // 128 * 128)
    assert t_tile % 128 == 0, "t_tile must be a multiple of 128 (output lane axis)"
    nT = pl.cdiv(T, t_tile)

    need = t_tile * per_row + 4 * 2 * D * 4
    vmem_limit = int(min(cap - 4 * 2**20, max(32 * 2**20, need + 2 * 2**20)))

    elems = B * T * D

    # Pass 1: per-utterance sum / sumsq (accumulator output block, P3 pattern).
    stats = pl.pallas_call(
        _make_stats_kernel(T, t_tile),
        out_shape=jax.ShapeDtypeStruct((B, 2, D), jnp.float32),
        grid=(B, nT),
        in_specs=[pl.BlockSpec((pl.Squeezed(), t_tile, D), lambda b, t: (b, t, 0))],
        out_specs=pl.BlockSpec((pl.Squeezed(), 2, D), lambda b, t: (b, 0, 0)),
        compiler_params=pltpu.CompilerParams(
            dimension_semantics=("parallel", "arbitrary"),
            vmem_limit_bytes=vmem_limit),
        cost_estimate=pl.CostEstimate(
            flops=3 * elems, transcendentals=0,
            bytes_accessed=elems * in_it + B * 2 * D * 4),
    )(x)

    # Pass 2: normalize each T tile and store it transposed (lane-dense T).
    return pl.pallas_call(
        _make_normalize_kernel(T, norm_var),
        out_shape=jax.ShapeDtypeStruct((B, D, T), out_dtype),
        grid=(B, nT),
        in_specs=[
            pl.BlockSpec((pl.Squeezed(), t_tile, D), lambda b, t: (b, t, 0)),
            pl.BlockSpec((pl.Squeezed(), 2, D), lambda b, t: (b, 0, 0)),
        ],
        out_specs=pl.BlockSpec((pl.Squeezed(), D, t_tile), lambda b, t: (b, 0, t)),
        compiler_params=pltpu.CompilerParams(
            dimension_semantics=("parallel", "parallel"),
            vmem_limit_bytes=vmem_limit),
        cost_estimate=pl.CostEstimate(
            flops=(4 if norm_var else 1) * elems,
            transcendentals=(B * D) if norm_var else 0,
            bytes_accessed=elems * (in_it + out_it) + B * 2 * D * 4),
    )(x, stats)


def get_feats(fbank_btd, norm_var=True, out_dtype=None, two_pass_t_tile=None):
    """Pallas equivalent of SpeakerNet.get_feats applied to precomputed fbank feats.

    fbank_btd: (B, T, D) — output of self.compute_features(wavs), frames-major.
    returns:   (B, D, T) — mean-normalized (and optionally variance-normalized,
               unbiased=False) features, same as the PyTorch code after
               transpose(1, 2).
    two_pass_t_tile: force the T-tiled two-pass path with this T tile
               (multiple of 128); normally chosen automatically from VMEM.
    """
    # TODO(synk): the Fbank front-end (framing + STFT + mel filterbank,
    # speakernet.features.Fbank) lives outside this module; features are
    # assumed precomputed.
    B, T, D = fbank_btd.shape
    if out_dtype is None:
        out_dtype = fbank_btd.dtype  # keep fp32 semantics of the torch code
    in_it = fbank_btd.dtype.itemsize
    out_it = jnp.dtype(out_dtype).itemsize

    cap = _vmem_capacity_bytes()         # 128 MiB on v5e/v6e, 64 MiB on v7x
    budget = (cap * 3) // 4              # headroom for compiler scratch

    # Live bytes per (frame x feat) element of one grid block:
    # double-buffered input + double-buffered output + ~3 f32 temporaries.
    per_elem = 2 * in_it + 2 * out_it + 3 * 4
    per_item = T * D * per_elem

    if two_pass_t_tile is None and per_item <= budget:
        return _get_feats_single_pass(fbank_btd, norm_var, out_dtype,
                                      budget, cap, per_item)
    return _get_feats_two_pass(fbank_btd, norm_var, out_dtype,
                               budget, cap, two_pass_t_tile)


# ----------------------------------------------------------------------------
# Reference + self-test
# ----------------------------------------------------------------------------
def _reference_get_feats(fbank_btd, norm_var=True):
    """Pure-jnp reference mirroring the PyTorch code (for correctness check)."""
    feats = jnp.transpose(fbank_btd, (0, 2, 1))
    feats = feats - jnp.mean(feats, axis=2, keepdims=True)
    if norm_var:
        var = jnp.mean(
            (feats - jnp.mean(feats, axis=2, keepdims=True)) ** 2,
            axis=2, keepdims=True)  # unbiased=False, matching the torch source
        feats = feats / jnp.sqrt(var + EPS)
    return feats


# TODO(synk): SpeakerNet.forward / init / extract_embedding are abstract
# (NotImplementedError) in this framework base class; the chunked-average
# embedding decorator wraps an unimplemented function, so it is not lowered.

if __name__ == "__main__":
    key = jax.random.PRNGKey(0)
    k1, k2 = jax.random.split(key)

    # --- single-pass path (typical small shapes: batch=2, frames=128, mels=80)
    B, T, D = 2, 128, 80
    # Stand-in for self.compute_features(wavs): deterministic synthetic fbank.
    fbank = jax.random.normal(k1, (B, T, D), dtype=jnp.float32) * 3.0 + 1.5

    out = jax.block_until_ready(get_feats(fbank, norm_var=True))
    ref = _reference_get_feats(fbank, norm_var=True)
    assert out.shape == (B, D, T), out.shape
    assert jnp.allclose(out, ref, atol=1e-5, rtol=1e-5), "CMVN mismatch vs reference"

    out_cmn = jax.block_until_ready(get_feats(fbank, norm_var=False))
    ref_cmn = _reference_get_feats(fbank, norm_var=False)
    assert jnp.allclose(out_cmn, ref_cmn, atol=1e-5, rtol=1e-5), "CMN mismatch"

    # --- two-pass (long-utterance) fallback, forced at a small, ragged shape
    B2, T2, D2 = 1, 300, 80   # T not a multiple of the 128 T tile
    fbank2 = jax.random.normal(k2, (B2, T2, D2), dtype=jnp.float32) * 3.0 + 1.5
    out2 = jax.block_until_ready(
        get_feats(fbank2, norm_var=True, two_pass_t_tile=128))
    ref2 = _reference_get_feats(fbank2, norm_var=True)
    assert out2.shape == (B2, D2, T2), out2.shape
    assert jnp.allclose(out2, ref2, atol=1e-4, rtol=1e-4), "two-pass CMVN mismatch"

    print("KERNEL_OK")
</pallas_src>

<mosaic_0001>
module attributes {stable_mosaic.version = 11 : i64} {
  func.func @kernel(%arg0: i32, %arg1: memref<1x128x80xf32, #tpu.memory_space<vmem>>, %arg2: memref<1x80x128xf32, #tpu.memory_space<vmem>>) attributes {dimension_semantics = [#tpu.dimension_semantics<parallel>], iteration_bounds = array<i64: 2>, scalar_prefetch = 0 : i64, scratch_operands = 0 : i64, tpu.core_type = #tpu.core_type<tc>, window_params = [{transform_indices = @transform_0, window_bounds = array<i64: 1, 128, 80>}, {transform_indices = @transform_1, window_bounds = array<i64: 1, 80, 128>}]} {
    %c0 = arith.constant 0 : index
    %c0_0 = arith.constant 0 : index
    %c0_1 = arith.constant 0 : index
    %0 = vector.load %arg1[%c0, %c0_0, %c0_1] : memref<1x128x80xf32, #tpu.memory_space<vmem>>, vector<1x128x80xf32>
    %cst = arith.constant dense<0.000000e+00> : vector<1x80xf32>
    %1 = vector.multi_reduction <add>, %0, %cst [1] : vector<1x128x80xf32> to vector<1x80xf32>
    %2 = vector.shape_cast %1 : vector<1x80xf32> to vector<1x1x80xf32>
    %cst_2 = arith.constant 1.280000e+02 : f32
    %3 = vector.broadcast %cst_2 : f32 to vector<1x1x80xf32>
    %4 = arith.divf %2, %3 : vector<1x1x80xf32>
    %5 = vector.broadcast %4 : vector<1x1x80xf32> to vector<1x128x80xf32>
    %6 = arith.subf %0, %5 : vector<1x128x80xf32>
    %7 = arith.mulf %6, %6 : vector<1x128x80xf32>
    %cst_3 = arith.constant dense<0.000000e+00> : vector<1x80xf32>
    %8 = vector.multi_reduction <add>, %7, %cst_3 [1] : vector<1x128x80xf32> to vector<1x80xf32>
    %9 = vector.shape_cast %8 : vector<1x80xf32> to vector<1x1x80xf32>
    %cst_4 = arith.constant 1.280000e+02 : f32
    %10 = vector.broadcast %cst_4 : f32 to vector<1x1x80xf32>
    %11 = arith.divf %9, %10 : vector<1x1x80xf32>
    %cst_5 = arith.constant 9.99999993E-9 : f32
    %12 = vector.broadcast %cst_5 : f32 to vector<1x1x80xf32>
    %13 = arith.addf %11, %12 : vector<1x1x80xf32>
    %14 = math.sqrt %13 : vector<1x1x80xf32>
    %cst_6 = arith.constant 1.000000e+00 : f32
    %15 = vector.broadcast %cst_6 : f32 to vector<1x1x80xf32>
    %16 = arith.divf %15, %14 : vector<1x1x80xf32>
    %17 = vector.broadcast %16 : vector<1x1x80xf32> to vector<1x128x80xf32>
    %18 = arith.mulf %6, %17 : vector<1x128x80xf32>
    %19 = tpu.transpose %18, [0, 2, 1] : vector<1x128x80xf32> -> vector<1x80x128xf32>
    %c0_7 = arith.constant 0 : index
    %c0_8 = arith.constant 0 : index
    %c0_9 = arith.constant 0 : index
    %20 = vector.load %arg2[%c0_7, %c0_8, %c0_9] : memref<1x80x128xf32, #tpu.memory_space<vmem>>, vector<1x80x128xf32>
    tpu.vector_store %arg2[%c0_7, %c0_8, %c0_9], %19 {strides = array<i32>} : memref<1x80x128xf32, #tpu.memory_space<vmem>>, vector<1x80x128xf32>,
    return
  }
  func.func @transform_0(%arg0: i32) -> (i32, i32, i32) {
    %c0_i32 = arith.constant 0 : i32
    %c0_i32_0 = arith.constant 0 : i32
    %c0_i32_1 = arith.constant 0 : i32
    return %arg0, %c0_i32, %c0_i32_0 : i32, i32, i32
  }
  func.func @transform_1(%arg0: i32) -> (i32, i32, i32) {
    %c0_i32 = arith.constant 0 : i32
    %c0_i32_0 = arith.constant 0 : i32
    %c0_i32_1 = arith.constant 0 : i32
    return %arg0, %c0_i32, %c0_i32_0 : i32, i32, i32
  }
}

</mosaic_0001>

<llo_original>
// kernel: tpu_custom_call.1
$region0: #{tpu_custom_call.1}
  #allocation0 [shape = 'u32[]', space=smem, size = 0x4, offset = 0x4, fixed_abs, tag = 'smem constant byte address 0x4 - core index']
  #allocation1 [shape = 'u32[144,128]{1,0:T(1,128)}', space=vmem, size = 0x12000, scoped, tag = 'internal scratch']
  %s0 = inlined_call_operand.vmem [shape: f32[2,128,80], index: 0, kind: input, shape index: {}]
  %s1 = inlined_call_operand.hbm [shape: f32[2,80,128], index: 1, kind: output, shape index: {}]
  %s2 = sld [smem:[#allocation0]]
  $region37: #{tpu_custom_call.1} parent=0
    _
  %s4 = ssub.s32 1, %s2
  %s5 = scalar_select 0, %s4, %s2
  $region1: #{tpu_custom_call.1} parent=0
    #allocation2 [shape = 'u8[81920]{0}', space=vmem, size = 0x14000, scoped, tag = 'output window, operand 0']
    #allocation3 [shape = 's32[2]{0}', space=sflag, size = 0x8, scoped, tag = 'scoped memory for tpu_custom_call.1']
    %6 = vsyncpa [#allocation3], 0
    %s7 = scalar_lea.sflag [#allocation3], 1
    %8 = vsyncpa %s7, 0
    loop: start=0, step=1, limit=4
    $region2: #{tpu_custom_call.1} parent=1 // loop_pre_header
      _
    $region3: #{tpu_custom_call.1} parent=1 // loop_header
      %s10 = sphi 0, %s14
      %p11 = scmp.ge.s32.totalorder %s10, 4
      %s20 = sphi 0, %s22
      %s23 = sphi 0, %s20
      %s24 = sphi 0, %s23
      %s40 = sphi 0, %s24
      %s46 = sphi 0, %s48
      %s49 = sphi 0, %s46
      %s50 = sphi 0, %s49
      %s66 = sphi 0, %s50
    $region4: #{tpu_custom_call.1} parent=1 // loop_header_branch
      %13 = sbr.rel (%p11) target = $region8
    $region5: #{tpu_custom_call.1} parent=1 // loop_body
      %s15 = ssub.s32 %s10, 1
      %s16 = ssub.s32 %s10, 2
      %s17 = sadd.s32 %s10, 1
      %s18 = ssub.s32 %s10, %s17
      %p19 = scmp.eq.s32.totalorder %s18, 0
      %s21 = sadd.s32 %s20, 1
      %s22 = scalar_select %p19, %s20, %s21
      %p25 = pneg %p19
      %p26 = scmp.eq.s32.totalorder %s10, 1
      %p27 = por %p25, %p26
      %p28 = scmp.ne.s32.totalorder %s20, %s23
      %p29 = scmp.eq.s32.totalorder %s10, 0
      %p30 = por %p28, %p29
      %p31 = scmp.ne.s32.totalorder %s20, %s23
      %p32 = scmp.eq.s32.totalorder %s15, 1
      %p33 = por %p31, %p32
      %p34 = scmp.ne.s32.totalorder %s23, %s24
      %p35 = scmp.eq.s32.totalorder %s15, 0
      %p36 = por %p34, %p35
      %p37 = scmp.ne.s32.totalorder %s23, %s24
      %p38 = scmp.eq.s32.totalorder %s16, 1
      %p39 = por %p37, %p38
      %p41 = scmp.ne.s32.totalorder %s24, %s40
      %p42 = scmp.eq.s32.totalorder %s16, 0
      %p43 = por %p41, %p42
      %s44 = ssub.s32 %s10, %s17
      %p45 = scmp.eq.s32.totalorder %s44, 0
      %s47 = sadd.s32 %s46, 1
      %s48 = scalar_select %p45, %s46, %s47
      %p51 = pneg %p45
      %p52 = scmp.eq.s32.totalorder %s10, 1
      %p53 = por %p51, %p52
      %p54 = scmp.ne.s32.totalorder %s46, %s49
      %p55 = scmp.eq.s32.totalorder %s10, 0
      %p56 = por %p54, %p55
      %p57 = scmp.ne.s32.totalorder %s46, %s49
      %p58 = scmp.eq.s32.totalorder %s15, 1
      %p59 = por %p57, %p58
      %p60 = scmp.ne.s32.totalorder %s49, %s50
      %p61 = scmp.eq.s32.totalorder %s15, 0
      %p62 = por %p60, %p61
      %p63 = scmp.ne.s32.totalorder %s49, %s50
      %p64 = scmp.eq.s32.totalorder %s16, 1
      %p65 = por %p63, %p64
      %p67 = scmp.ne.s32.totalorder %s50, %s66
      %p68 = scmp.eq.s32.totalorder %s16, 0
      %p69 = por %p67, %p68
      %p70 = scmp.le.s32.totalorder 1, %s10
      %p71 = scmp.lt.s32.totalorder %s10, 3
      %p72 = pnand %p70, %p71
      %p73 = pneg %p72
      // Predicated region
      $region9: #{tpu_custom_call.1} parent=5 // pred_check
        _
      $region10: #{tpu_custom_call.1} parent=5 // pred_check_branch
        %75 = sbr.rel (%p72) target = $region12
      $region11: #{tpu_custom_call.1} parent=5 // pred_region
        %s76 = ssub.s32 %s10, 1
      $region12: #{tpu_custom_call.1} parent=5 // pred_fallthru
        _
      %p77 = scmp.lt.s32.totalorder %s10, 2
      // Predicated region
      $region13: #{tpu_custom_call.1} parent=5 // pred_check
        %p78 = pneg %p77
      $region14: #{tpu_custom_call.1} parent=5 // pred_check_branch
        %80 = sbr.rel (%p78) target = $region16
      $region15: #{tpu_custom_call.1} parent=5 // pred_region
        // Predicated region
        $region17: #{tpu_custom_call.1} parent=15 // pred_check
          %p81 = pneg %p30
        $region18: #{tpu_custom_call.1} parent=15 // pred_check_branch
          %83 = sbr.rel (%p81) target = $region20
        $region19: #{tpu_custom_call.1} parent=15 // pred_region
          %p84 = scmp.lt.s32.totalorder %s10, 1
          %s85 = scalar_select %p84, %s10, 1
          %s86 = smul.addr %s85, 16
          %s87 = smul.addr %s86, 8
          %s88 = scalar_lea.vmem %s0, %s87
        $region20: #{tpu_custom_call.1} parent=15 // pred_fallthru
          _
      $region16: #{tpu_custom_call.1} parent=5 // pred_fallthru
        _
      %p89 = scmp.le.s32.totalorder 1, %s10
      %p90 = scmp.lt.s32.totalorder %s10, 3
      %p91 = pnand %p89, %p90
      %p92 = pneg %p91
      // Predicated region
      $region21: #{tpu_custom_call.1} parent=5 // pred_check
        _
      $region22: #{tpu_custom_call.1} parent=5 // pred_check_branch
        %94 = sbr.rel (%p91) target = $region24
      $region23: #{tpu_custom_call.1} parent=5 // pred_region
        %s95 = ssub.s32 %s10, 1
        %p96 = scmp.lt.s32.totalorder %s15, 1
        %s97 = scalar_select %p96, %s15, 1
        %s98 = smul.addr %s97, 16
        %s99 = smul.addr %s98, 8
        %s100 = scalar_lea.vmem %s0, %s99
        %p101 = pneg %p36
        %p102 = pneg %p33
        %p103 = pneg %p62
        %p104 = pneg %p59
        %s105 = sand.u32 %s49, 1
        %s106 = scalar_lea.sflag [#allocation3], %s105
        %s107 = sand.u32 %s49, 1
        %s108 = smul.addr %s107, 80
        %s109 = scalar_lea.vmem [#allocation2], %s108
        %p110 = scmp.lt.s32.totalorder %s15, 1
        %s111 = scalar_select %p110, %s15, 1
        %s112 = smul.addr %s111, 16
        %s113 = smul.addr %s112, 8
        %s114 = scalar_lea.vmem %s0, %s113
        %v115 = vld [vmem:[%s114] sm:$0xff]
        %v116 = vld [vmem:[%s114 + $0x8] sm:$0xff]
        %v117 = vld [vmem:[%s114 + $0x10] sm:$0xff]
        %v118 = vld [vmem:[%s114 + $0x18] sm:$0xff]
        %v119 = vld [vmem:[%s114 + $0x20] sm:$0xff]
        %v120 = vld [vmem:[%s114 + $0x28] sm:$0xff]
        %v121 = vld [vmem:[%s114 + $0x30] sm:$0xff]
        %v122 = vld [vmem:[%s114 + $0x38] sm:$0xff]
        %v123 = vld [vmem:[%s114 + $0x40] sm:$0xff]
        %v124 = vld [vmem:[%s114 + $0x48] sm:$0xff]
        %v125 = vld [vmem:[%s114 + $0x50] sm:$0xff]
        %v126 = vld [vmem:[%s114 + $0x58] sm:$0xff]
        %v127 = vld [vmem:[%s114 + $0x60] sm:$0xff]
        %v128 = vld [vmem:[%s114 + $0x68] sm:$0xff]
        %v129 = vld [vmem:[%s114 + $0x70] sm:$0xff]
        %v130 = vld [vmem:[%s114 + $0x78] sm:$0xff]
        %vm131 = vcmask 654336
        %v132 = vsel %vm131, %v115, 0.0
        %v133 = vsel %vm131, %v116, 0.0
        %v134 = vadd.f32 %v132, %v133
        %v135 = vsel %vm131, %v117, 0.0
        %v136 = vadd.f32 %v134, %v135
        %v137 = vsel %vm131, %v118, 0.0
        %v138 = vadd.f32 %v136, %v137
        %v139 = vsel %vm131, %v119, 0.0
        %v140 = vadd.f32 %v138, %v139
        %v141 = vsel %vm131, %v120, 0.0
        %v142 = vadd.f32 %v140, %v141
        %v143 = vsel %vm131, %v121, 0.0
        %v144 = vadd.f32 %v142, %v143
        %v145 = vsel %vm131, %v122, 0.0
        %v146 = vadd.f32 %v144, %v145
        %v147 = vsel %vm131, %v123, 0.0
        %v148 = vadd.f32 %v146, %v147
        %v149 = vsel %vm131, %v124, 0.0
        %v150 = vadd.f32 %v148, %v149
        %v151 = vsel %vm131, %v125, 0.0
        %v152 = vadd.f32 %v150, %v151
        %v153 = vsel %vm131, %v126, 0.0
        %v154 = vadd.f32 %v152, %v153
        %v155 = vsel %vm131, %v127, 0.0
        %v156 = vadd.f32 %v154, %v155
        %v157 = vsel %vm131, %v128, 0.0
        %v158 = vadd.f32 %v156, %v157
        %v159 = vsel %vm131, %v129, 0.0
        %v160 = vadd.f32 %v158, %v159
        %v161 = vsel %vm131, %v130, 0.0
        %v162 = vadd.f32 %v160, %v161
        %v163 = vrot.slane %v162, 4
        %v164 = vadd.f32 %v162, %v163
        %v165 = vrot.slane %v164, 2
        %v166 = vadd.f32 %v164, %v165
        %v167 = vrot.slane %v166, 1
        %v168 = vadd.f32 %v166, %v167
        %v169 = vrcp.pop 128.0
        %v170 = vmul.f32 %v168, %v169
        %v171 = vsub.f32 %v115, %v170
        %v172 = vsub.f32 %v116, %v170
        %v173 = vsub.f32 %v117, %v170
        %v174 = vsub.f32 %v118, %v170
        %v175 = vsub.f32 %v119, %v170
        %v176 = vsub.f32 %v120, %v170
        %v177 = vsub.f32 %v121, %v170
        %v178 = vsub.f32 %v122, %v170
        %v179 = vsub.f32 %v123, %v170
        %v180 = vsub.f32 %v124, %v170
        %v181 = vsub.f32 %v125, %v170
        %v182 = vsub.f32 %v126, %v170
        %v183 = vsub.f32 %v127, %v170
        %v184 = vsub.f32 %v128, %v170
        %v185 = vsub.f32 %v129, %v170
        %v186 = vsub.f32 %v130, %v170
        %v187 = vmul.f32 %v171, %v171
        %v188 = vmul.f32 %v172, %v172
        %v189 = vmul.f32 %v173, %v173
        %v190 = vmul.f32 %v174, %v174
        %v191 = vmul.f32 %v175, %v175
        %v192 = vmul.f32 %v176, %v176
        %v193 = vmul.f32 %v177, %v177
        %v194 = vmul.f32 %v178, %v178
        %v195 = vmul.f32 %v179, %v179
        %v196 = vmul.f32 %v180, %v180
        %v197 = vmul.f32 %v181, %v181
        %v198 = vmul.f32 %v182, %v182
        %v199 = vmul.f32 %v183, %v183
        %v200 = vmul.f32 %v184, %v184
        %v201 = vmul.f32 %v185, %v185
        %v202 = vmul.f32 %v186, %v186
        %v203 = vsel %vm131, %v187, 0.0
        %v204 = vsel %vm131, %v188, 0.0
        %v205 = vadd.f32 %v203, %v204
        %v206 = vsel %vm131, %v189, 0.0
        %v207 = vadd.f32 %v205, %v206
        %v208 = vsel %vm131, %v190, 0.0
        %v209 = vadd.f32 %v207, %v208
        %v210 = vsel %vm131, %v191, 0.0
        %v211 = vadd.f32 %v209, %v210
        %v212 = vsel %vm131, %v192, 0.0
        %v213 = vadd.f32 %v211, %v212
        %v214 = vsel %vm131, %v193, 0.0
        %v215 = vadd.f32 %v213, %v214
        %v216 = vsel %vm131, %v194, 0.0
        %v217 = vadd.f32 %v215, %v216
        %v218 = vsel %vm131, %v195, 0.0
        %v219 = vadd.f32 %v217, %v218
        %v220 = vsel %vm131, %v196, 0.0
        %v221 = vadd.f32 %v219, %v220
        %v222 = vsel %vm131, %v197, 0.0
        %v223 = vadd.f32 %v221, %v222
        %v224 = vsel %vm131, %v198, 0.0
        %v225 = vadd.f32 %v223, %v224
        %v226 = vsel %vm131, %v199, 0.0
        %v227 = vadd.f32 %v225, %v226
        %v228 = vsel %vm131, %v200, 0.0
        %v229 = vadd.f32 %v227, %v228
        %v230 = vsel %vm131, %v201, 0.0
        %v231 = vadd.f32 %v229, %v230
        %v232 = vsel %vm131, %v202, 0.0
        %v233 = vadd.f32 %v231, %v232
        %v234 = vrot.slane %v233, 4
        %v235 = vadd.f32 %v233, %v234
        %v236 = vrot.slane %v235, 2
        %v237 = vadd.f32 %v235, %v236
        %v238 = vrot.slane %v237, 1
        %v239 = vadd.f32 %v237, %v238
        %v240 = vmul.f32 %v239, %v169
        %v241 = vadd.f32 %v240, 1e-08
        %v242 = vrsqrt.pop %v241
        %v243 = vmul.f32 %v241, %v242
        %vm244 = vcmp.eq.f32.partialorder %v241, inf
        %v245 = vsel %vm244, %v241, %v243
        %vm246 = vcmp.eq.f32.partialorder %v241, 0.0
        %v247 = vand.u32 %v241, 2147483648
        %v248 = vsel %vm246, %v247, %v245
        %v249 = vrcp.pop %v248
        %v250 = vmul.f32 1.0, %v249
        %v251 = vmul.f32 %v171, %v250
        %v252 = vmul.f32 %v172, %v250
        %v253 = vmul.f32 %v173, %v250
        %v254 = vmul.f32 %v174, %v250
        %v255 = vmul.f32 %v175, %v250
        %v256 = vmul.f32 %v176, %v250
        %v257 = vmul.f32 %v177, %v250
        %v258 = vmul.f32 %v178, %v250
        %v259 = vmul.f32 %v179, %v250
        %v260 = vmul.f32 %v180, %v250
        %v261 = vmul.f32 %v181, %v250
        %v262 = vmul.f32 %v182, %v250
        %v263 = vmul.f32 %v183, %v250
        %v264 = vmul.f32 %v184, %v250
        %v265 = vmul.f32 %v185, %v250
        %v266 = vmul.f32 %v186, %v250
        %267 = vxpose.xlu0.b32.start [1/16] %v251, 128
        %268 = vxpose.xlu0.b32.cont [2/16] %v252, 128
        %269 = vxpose.xlu0.b32.cont [3/16] %v253, 128
        %270 = vxpose.xlu0.b32.cont [4/16] %v254, 128
        %271 = vxpose.xlu0.b32.cont [5/16] %v255, 128
        %272 = vxpose.xlu0.b32.cont [6/16] %v256, 128
        %273 = vxpose.xlu0.b32.cont [7/16] %v257, 128
        %274 = vxpose.xlu0.b32.cont [8/16] %v258, 128
        %275 = vxpose.xlu0.b32.cont [9/16] %v259, 128
        %276 = vxpose.xlu0.b32.cont [10/16] %v260, 128
        %277 = vxpose.xlu0.b32.cont [11/16] %v261, 128
        %278 = vxpose.xlu0.b32.cont [12/16] %v262, 128
        %279 = vxpose.xlu0.b32.cont [13/16] %v263, 128
        %280 = vxpose.xlu0.b32.cont [14/16] %v264, 128
        %281 = vxpose.xlu0.b32.cont [15/16] %v265, 128
        %282 = vxpose.xlu0.b32.end [16/16] %v266, 128
        %v283 = vpop.trf.xlu0
        %v284 = vpop.trf.xlu0
        %v285 = vpop.trf.xlu0
        %v286 = vpop.trf.xlu0
        %v287 = vpop.trf.xlu0
        %v288 = vpop.trf.xlu0
        %v289 = vpop.trf.xlu0
        %v290 = vpop.trf.xlu0
        %v291 = vpop.trf.xlu0
        %v292 = vpop.trf.xlu0
        %v293 = vpop.trf.xlu0
        %v294 = vpop.trf.xlu0
        %v295 = vpop.trf.xlu0
        %v296 = vpop.trf.xlu0
        %v297 = vpop.trf.xlu0
        %v298 = vpop.trf.xlu0
        %299 = vst [vmem:[%s109] sm:$0xff] %v283
        %300 = vst [vmem:[%s109 + $0x8] sm:$0xff] %v284
        %301 = vst [vmem:[%s109 + $0x10] sm:$0xff] %v285
        %302 = vst [vmem:[%s109 + $0x18] sm:$0xff] %v286
        %303 = vst [vmem:[%s109 + $0x20] sm:$0xff] %v287
        %304 = vst [vmem:[%s109 + $0x28] sm:$0xff] %v288
        %305 = vst [vmem:[%s109 + $0x30] sm:$0xff] %v289
        %306 = vst [vmem:[%s109 + $0x38] sm:$0xff] %v290
        %307 = vst [vmem:[%s109 + $0x40] sm:$0xff] %v291
        %308 = vst [vmem:[%s109 + $0x48] sm:$0xff] %v292
        %s309 = sand.u32 %s49, 1
        %s310 = scalar_lea.sflag [#allocation3], %s309
        %s311 = sand.u32 %s49, 1
        %s312 = smul.addr %s311, 80
        %s313 = scalar_lea.vmem [#allocation2], %s312
        // Predicated region
        $region25: #{tpu_custom_call.1} parent=23 // pred_check
          %p314 = pneg %p59
        $region26: #{tpu_custom_call.1} parent=23 // pred_check_branch
          %316 = sbr.rel (%p314) target = $region28
        $region27: #{tpu_custom_call.1} parent=23 // pred_region
          %s318 = ssub.s32 1280, 1280
          %319 = vsyncadd %s310, %s318
          %s320 = smul.addr %s15, 10
          %s321 = smul.addr %s320, 128
          %s322 = scalar_lea.hbm %s1, %s321
          %s323 = sshll.u32 %s313, 4
          %s324 = int_to_ptr.vmem [resolvable:$true] %s323
          %329 = dma.vmem_to_hbm [thread:$0]  %s324, 1280, %s322, %s310, 128, 128, 8
        $region28: #{tpu_custom_call.1} parent=23 // pred_fallthru
          _
      $region24: #{tpu_custom_call.1} parent=5 // pred_fallthru
        _
      %p330 = scmp.le.s32.totalorder 2, %s10
      // Predicated region
      $region29: #{tpu_custom_call.1} parent=5 // pred_check
        %p331 = pneg %p330
      $region30: #{tpu_custom_call.1} parent=5 // pred_check_branch
        %333 = sbr.rel (%p331) target = $region32
      $region31: #{tpu_custom_call.1} parent=5 // pred_region
        %s334 = ssub.s32 %s10, 2
        // Predicated region
        $region33: #{tpu_custom_call.1} parent=31 // pred_check
          %p335 = pneg %p65
        $region34: #{tpu_custom_call.1} parent=31 // pred_check_branch
          %337 = sbr.rel (%p335) target = $region36
        $region35: #{tpu_custom_call.1} parent=31 // pred_region
          %s338 = sand.u32 %s50, 1
          %s339 = scalar_lea.sflag [#allocation3], %s338
          %s340 = sand.u32 %s50, 1
          %s341 = smul.addr %s340, 80
          %s342 = scalar_lea.vmem [#allocation2], %s341
          %343 = dma.done %s339, 1280
        $region36: #{tpu_custom_call.1} parent=31 // pred_fallthru
          _
      $region32: #{tpu_custom_call.1} parent=5 // pred_fallthru
        _
    $region6: #{tpu_custom_call.1} parent=1 // loop_footer
      %s14 = sadd.s32 1, %s10
    $region7: #{tpu_custom_call.1} parent=1 // loop_footer_branch
      %9 = sbr.rel target = $region3
    $region8: #{tpu_custom_call.1} parent=1 // loop_exit
      _
    %344 = vsyncpa [#allocation3], 1
    %s345 = scalar_lea.sflag [#allocation3], 1
    %346 = vsyncpa %s345, 1

</llo_original>
